<compile_context>
chip_gen: v7x
topology: tpu7x:2x2x1
jax: 0.10.0
libtpu: 0.0.40
codegen_flags: <defaults>
</compile_context>

<pallas_src>
import functools

import jax
import jax.numpy as jnp
from jax.experimental import pallas as pl
from jax.experimental.pallas import tpu as pltpu

EPS = 1e-5  # nn.BatchNorm2d default


def _dsc_kernel(p1_ref, p2_ref, x_ref, o_ref, *, K, W, HW, N, Cin, Cout):
    """Fused depthwise conv + ReLU + pointwise conv + ReLU (BN pre-folded).

    p1_ref : (N*Cin, K*K+1) VMEM  [per-row folded depthwise taps | folded BN1 bias]
    p2_ref : (Cout,  Cin+1) VMEM  [folded 1x1 weights | folded BN2 bias]
    x_ref  : (N*Cin, H*W + PAD) VMEM packed input (row = n*Cin + c, lane = h*W + w)
    o_ref  : (N*Cout, H*W)      VMEM packed output (row = n*Cout + co)
    """
    KK = K * K

    # ---- depthwise conv (valid, stride 1, groups=Cin) + folded BN1 + ReLU ----
    # One static lane-shifted slice + FMA per tap, covering all N*Cin rows at
    # once.  The tap weight is a (rows, 1) column lane-broadcast once per tap.
    acc = x_ref[:, 0:HW] * p1_ref[:, 0:1]                       # tap (0, 0)
    for di in range(K):
        for dj in range(K):
            if di == 0 and dj == 0:
                continue
            s = di * W + dj                                     # flattened tap shift
            t = di * K + dj
            acc = acc + x_ref[:, s:s + HW] * p1_ref[:, t:t + 1]
    act = jnp.maximum(acc + p1_ref[:, KK:KK + 1], 0.0)          # + bias1, ReLU1

    # ---- pointwise 1x1 conv + folded BN2 + ReLU (lane-dense, exact f32) ----
    # Per image: Cin FMAs of (1, H*W) activation rows against (Cout, 1) weight
    # columns, accumulating the full (Cout, H*W) slab; stores are unmasked,
    # full-lane and sublane-group aligned.
    b2 = p2_ref[:, Cin:Cin + 1]                                 # (Cout, 1)
    for n in range(N):
        base = n * Cin
        z = act[base:base + 1, :] * p2_ref[:, 0:1]
        for c in range(1, Cin):
            z = z + act[base + c:base + c + 1, :] * p2_ref[:, c:c + 1]
        o_ref[n * Cout:(n + 1) * Cout, :] = jnp.maximum(z + b2, 0.0)


def depthwise_separable_conv_pallas(x, params):
    """x: (N, Cin, H, W) float32 (NCHW). Returns (N, Cout, Ho, Wo) float32."""
    (dw_w, dw_b, g1, b1, m1, v1, pw_w, pw_b, g2, b2, m2, v2) = params
    N, Cin, H, W = x.shape
    K = dw_w.shape[-1]                   # depthwise weight: (Cin, 1, K, K)
    Cout = pw_w.shape[0]                 # pointwise weight: (Cout, Cin, 1, 1)
    Ho, Wo = H - K + 1, W - K + 1
    HW = H * W
    PAD = (K - 1) * W + (K - 1)          # max flattened tap shift

    # ---- fold eval-mode BatchNorms into the conv weights / biases ----
    s1 = g1 * jax.lax.rsqrt(v1 + EPS)                           # (Cin,)
    dww = dw_w.reshape(Cin, K * K) * s1[:, None]                # (Cin, K*K)
    dwb = (dw_b - m1) * s1 + b1                                 # (Cin,)
    s2 = g2 * jax.lax.rsqrt(v2 + EPS)                           # (Cout,)
    pww = pw_w.reshape(Cout, Cin) * s2[:, None]                 # (Cout, Cin)
    pwb = (pw_b - m2) * s2 + b2                                 # (Cout,)

    # ---- pre-arrange params as lane-broadcastable per-row columns (VMEM) ----
    p1 = jnp.concatenate(
        [jnp.tile(dww, (N, 1)), jnp.tile(dwb, N)[:, None]], axis=1
    ).astype(jnp.float32)                                       # (N*Cin, K*K+1)
    p2 = jnp.concatenate([pww, pwb[:, None]], axis=1).astype(jnp.float32)  # (Cout, Cin+1)

    # ---- pack the whole batch lane-dense: (N*Cin, H*W), pad for tap shifts ----
    x2d = jnp.pad(x.reshape(N * Cin, HW).astype(jnp.float32), ((0, 0), (0, PAD)))

    kernel = functools.partial(
        _dsc_kernel, K=K, W=W, HW=HW, N=N, Cin=Cin, Cout=Cout)

    flops = 2 * N * Ho * Wo * Cin * (K * K + Cout)
    bytes_accessed = (x2d.size + p1.size + p2.size + N * Cout * HW) * 4

    slab = pl.pallas_call(
        kernel,
        out_shape=jax.ShapeDtypeStruct((N * Cout, HW), jnp.float32),
        grid=(1,),                                   # single step: size is overhead-bound
        in_specs=[
            pl.BlockSpec((N * Cin, K * K + 1), lambda i: (0, 0)),
            pl.BlockSpec((Cout, Cin + 1), lambda i: (0, 0)),
            pl.BlockSpec((N * Cin, HW + PAD), lambda i: (0, 0)),
        ],
        out_specs=pl.BlockSpec((N * Cout, HW), lambda i: (0, 0)),
        compiler_params=pltpu.CompilerParams(
            dimension_semantics=("arbitrary",)),
        cost_estimate=pl.CostEstimate(
            flops=flops, transcendentals=0, bytes_accessed=bytes_accessed),
    )(p1, p2, x2d)

    # un-do the lane-dense packing (cheap wrapper reshape + slice)
    return slab.reshape(N, Cout, H, W)[:, :, :Ho, :Wo]


def _reference(x, params):
    """Pure-JAX NCHW reference matching the PyTorch module's eval-mode forward."""
    (dw_w, dw_b, g1, b1, m1, v1, pw_w, pw_b, g2, b2, m2, v2) = params
    Cin = x.shape[1]
    y = jax.lax.conv_general_dilated(
        x, dw_w, window_strides=(1, 1), padding="VALID",
        dimension_numbers=("NCHW", "OIHW", "NCHW"), feature_group_count=Cin)
    y = y + dw_b[None, :, None, None]
    y = (y - m1[None, :, None, None]) * jax.lax.rsqrt(v1[None, :, None, None] + EPS)
    y = y * g1[None, :, None, None] + b1[None, :, None, None]
    y = jnp.maximum(y, 0.0)
    z = jax.lax.conv_general_dilated(
        y, pw_w, window_strides=(1, 1), padding="VALID",
        dimension_numbers=("NCHW", "OIHW", "NCHW"))
    z = z + pw_b[None, :, None, None]
    z = (z - m2[None, :, None, None]) * jax.lax.rsqrt(v2[None, :, None, None] + EPS)
    z = z * g2[None, :, None, None] + b2[None, :, None, None]
    return jnp.maximum(z, 0.0)


if __name__ == "__main__":
    N, CH_IN, CH_OUT, H, W, K = 2, 4, 8, 16, 16, 3

    key = jax.random.PRNGKey(0)
    ks = jax.random.split(key, 7)
    x = jax.random.normal(ks[0], (N, CH_IN, H, W), jnp.float32)

    # parameters in PyTorch-native shapes (Conv2d OIHW, BN per-channel vectors)
    dw_w = 0.2 * jax.random.normal(ks[1], (CH_IN, 1, K, K), jnp.float32)
    dw_b = 0.1 * jax.random.normal(ks[2], (CH_IN,), jnp.float32)
    pw_w = 0.2 * jax.random.normal(ks[3], (CH_OUT, CH_IN, 1, 1), jnp.float32)
    pw_b = 0.1 * jax.random.normal(ks[4], (CH_OUT,), jnp.float32)
    g1 = 1.0 + 0.1 * jax.random.normal(ks[5], (CH_IN,), jnp.float32)
    b1 = 0.05 * jnp.arange(CH_IN, dtype=jnp.float32)
    m1 = 0.01 * jnp.arange(CH_IN, dtype=jnp.float32)
    v1 = 1.0 + 0.02 * jnp.arange(CH_IN, dtype=jnp.float32)
    g2 = 1.0 + 0.1 * jax.random.normal(ks[6], (CH_OUT,), jnp.float32)
    b2 = 0.03 * jnp.arange(CH_OUT, dtype=jnp.float32)
    m2 = 0.02 * jnp.arange(CH_OUT, dtype=jnp.float32)
    v2 = 1.0 + 0.01 * jnp.arange(CH_OUT, dtype=jnp.float32)
    params = (dw_w, dw_b, g1, b1, m1, v1, pw_w, pw_b, g2, b2, m2, v2)

    out = depthwise_separable_conv_pallas(x, params)
    out = jax.block_until_ready(out)

    ref = _reference(x, params)
    assert out.shape == (N, CH_OUT, H - K + 1, W - K + 1)
    err = float(jnp.max(jnp.abs(out - ref)))
    assert err < 1e-4, f"mismatch vs reference: {err}"

    print("KERNEL_OK")
</pallas_src>

<mosaic_0001>
module attributes {stable_mosaic.version = 11 : i64} {
  func.func @_dsc_kernel(%arg0: i32, %arg1: memref<8x10xf32, #tpu.memory_space<vmem>>, %arg2: memref<8x5xf32, #tpu.memory_space<vmem>>, %arg3: memref<8x290xf32, #tpu.memory_space<vmem>>, %arg4: memref<16x256xf32, #tpu.memory_space<vmem>>) attributes {dimension_semantics = [#tpu.dimension_semantics<arbitrary>], iteration_bounds = array<i64: 1>, scalar_prefetch = 0 : i64, scratch_operands = 0 : i64, tpu.core_type = #tpu.core_type<tc>, window_params = [{pipeline_mode = #tpu.pipeline_mode<synchronous>, transform_indices = @transform_0, window_bounds = array<i64: 8, 10>}, {pipeline_mode = #tpu.pipeline_mode<synchronous>, transform_indices = @transform_1, window_bounds = array<i64: 8, 5>}, {pipeline_mode = #tpu.pipeline_mode<synchronous>, transform_indices = @transform_2, window_bounds = array<i64: 8, 290>}, {pipeline_mode = #tpu.pipeline_mode<synchronous>, transform_indices = @transform_3, window_bounds = array<i64: 16, 256>}]} {
    %c0 = arith.constant 0 : index
    %c0_0 = arith.constant 0 : index
    %0 = vector.load %arg3[%c0, %c0_0] : memref<8x290xf32, #tpu.memory_space<vmem>>, vector<8x256xf32>
    %c0_1 = arith.constant 0 : index
    %c0_2 = arith.constant 0 : index
    %1 = vector.load %arg1[%c0_1, %c0_2] : memref<8x10xf32, #tpu.memory_space<vmem>>, vector<8x1xf32>
    %2 = vector.broadcast %1 : vector<8x1xf32> to vector<8x256xf32>
    %3 = arith.mulf %0, %2 : vector<8x256xf32>
    %c0_3 = arith.constant 0 : index
    %c1 = arith.constant 1 : index
    %4 = vector.load %arg3[%c0_3, %c1] : memref<8x290xf32, #tpu.memory_space<vmem>>, vector<8x256xf32>
    %c0_4 = arith.constant 0 : index
    %c1_5 = arith.constant 1 : index
    %5 = vector.load %arg1[%c0_4, %c1_5] : memref<8x10xf32, #tpu.memory_space<vmem>>, vector<8x1xf32>
    %6 = vector.broadcast %5 : vector<8x1xf32> to vector<8x256xf32>
    %7 = arith.mulf %4, %6 : vector<8x256xf32>
    %8 = arith.addf %3, %7 : vector<8x256xf32>
    %c0_6 = arith.constant 0 : index
    %c2 = arith.constant 2 : index
    %9 = vector.load %arg3[%c0_6, %c2] : memref<8x290xf32, #tpu.memory_space<vmem>>, vector<8x256xf32>
    %c0_7 = arith.constant 0 : index
    %c2_8 = arith.constant 2 : index
    %10 = vector.load %arg1[%c0_7, %c2_8] : memref<8x10xf32, #tpu.memory_space<vmem>>, vector<8x1xf32>
    %11 = vector.broadcast %10 : vector<8x1xf32> to vector<8x256xf32>
    %12 = arith.mulf %9, %11 : vector<8x256xf32>
    %13 = arith.addf %8, %12 : vector<8x256xf32>
    %c0_9 = arith.constant 0 : index
    %c16 = arith.constant 16 : index
    %14 = vector.load %arg3[%c0_9, %c16] : memref<8x290xf32, #tpu.memory_space<vmem>>, vector<8x256xf32>
    %c0_10 = arith.constant 0 : index
    %c3 = arith.constant 3 : index
    %15 = vector.load %arg1[%c0_10, %c3] : memref<8x10xf32, #tpu.memory_space<vmem>>, vector<8x1xf32>
    %16 = vector.broadcast %15 : vector<8x1xf32> to vector<8x256xf32>
    %17 = arith.mulf %14, %16 : vector<8x256xf32>
    %18 = arith.addf %13, %17 : vector<8x256xf32>
    %c0_11 = arith.constant 0 : index
    %c17 = arith.constant 17 : index
    %19 = vector.load %arg3[%c0_11, %c17] : memref<8x290xf32, #tpu.memory_space<vmem>>, vector<8x256xf32>
    %c0_12 = arith.constant 0 : index
    %c4 = arith.constant 4 : index
    %20 = vector.load %arg1[%c0_12, %c4] : memref<8x10xf32, #tpu.memory_space<vmem>>, vector<8x1xf32>
    %21 = vector.broadcast %20 : vector<8x1xf32> to vector<8x256xf32>
    %22 = arith.mulf %19, %21 : vector<8x256xf32>
    %23 = arith.addf %18, %22 : vector<8x256xf32>
    %c0_13 = arith.constant 0 : index
    %c18 = arith.constant 18 : index
    %24 = vector.load %arg3[%c0_13, %c18] : memref<8x290xf32, #tpu.memory_space<vmem>>, vector<8x256xf32>
    %c0_14 = arith.constant 0 : index
    %c5 = arith.constant 5 : index
    %25 = vector.load %arg1[%c0_14, %c5] : memref<8x10xf32, #tpu.memory_space<vmem>>, vector<8x1xf32>
    %26 = vector.broadcast %25 : vector<8x1xf32> to vector<8x256xf32>
    %27 = arith.mulf %24, %26 : vector<8x256xf32>
    %28 = arith.addf %23, %27 : vector<8x256xf32>
    %c0_15 = arith.constant 0 : index
    %c32 = arith.constant 32 : index
    %29 = vector.load %arg3[%c0_15, %c32] : memref<8x290xf32, #tpu.memory_space<vmem>>, vector<8x256xf32>
    %c0_16 = arith.constant 0 : index
    %c6 = arith.constant 6 : index
    %30 = vector.load %arg1[%c0_16, %c6] : memref<8x10xf32, #tpu.memory_space<vmem>>, vector<8x1xf32>
    %31 = vector.broadcast %30 : vector<8x1xf32> to vector<8x256xf32>
    %32 = arith.mulf %29, %31 : vector<8x256xf32>
    %33 = arith.addf %28, %32 : vector<8x256xf32>
    %c0_17 = arith.constant 0 : index
    %c33 = arith.constant 33 : index
    %34 = vector.load %arg3[%c0_17, %c33] : memref<8x290xf32, #tpu.memory_space<vmem>>, vector<8x256xf32>
    %c0_18 = arith.constant 0 : index
    %c7 = arith.constant 7 : index
    %35 = vector.load %arg1[%c0_18, %c7] : memref<8x10xf32, #tpu.memory_space<vmem>>, vector<8x1xf32>
    %36 = vector.broadcast %35 : vector<8x1xf32> to vector<8x256xf32>
    %37 = arith.mulf %34, %36 : vector<8x256xf32>
    %38 = arith.addf %33, %37 : vector<8x256xf32>
    %c0_19 = arith.constant 0 : index
    %c34 = arith.constant 34 : index
    %39 = vector.load %arg3[%c0_19, %c34] : memref<8x290xf32, #tpu.memory_space<vmem>>, vector<8x256xf32>
    %c0_20 = arith.constant 0 : index
    %c8 = arith.constant 8 : index
    %40 = vector.load %arg1[%c0_20, %c8] : memref<8x10xf32, #tpu.memory_space<vmem>>, vector<8x1xf32>
    %41 = vector.broadcast %40 : vector<8x1xf32> to vector<8x256xf32>
    %42 = arith.mulf %39, %41 : vector<8x256xf32>
    %43 = arith.addf %38, %42 : vector<8x256xf32>
    %c0_21 = arith.constant 0 : index
    %c9 = arith.constant 9 : index
    %44 = vector.load %arg1[%c0_21, %c9] : memref<8x10xf32, #tpu.memory_space<vmem>>, vector<8x1xf32>
    %45 = vector.broadcast %44 : vector<8x1xf32> to vector<8x256xf32>
    %46 = arith.addf %43, %45 : vector<8x256xf32>
    %cst = arith.constant 0.000000e+00 : f32
    %47 = vector.broadcast %cst : f32 to vector<8x256xf32>
    %48 = arith.maximumf %46, %47 : vector<8x256xf32>
    %c0_22 = arith.constant 0 : index
    %c4_23 = arith.constant 4 : index
    %49 = vector.load %arg2[%c0_22, %c4_23] : memref<8x5xf32, #tpu.memory_space<vmem>>, vector<8x1xf32>
    %50 = vector.extract_strided_slice %48 {offsets = [0, 0], sizes = [1, 256], strides = [1, 1]} : vector<8x256xf32> to vector<1x256xf32>
    %c0_24 = arith.constant 0 : index
    %c0_25 = arith.constant 0 : index
    %51 = vector.load %arg2[%c0_24, %c0_25] : memref<8x5xf32, #tpu.memory_space<vmem>>, vector<8x1xf32>
    %52 = vector.broadcast %50 : vector<1x256xf32> to vector<8x256xf32>
    %53 = vector.broadcast %51 : vector<8x1xf32> to vector<8x256xf32>
    %54 = arith.mulf %52, %53 : vector<8x256xf32>
    %55 = vector.extract_strided_slice %48 {offsets = [1, 0], sizes = [1, 256], strides = [1, 1]} : vector<8x256xf32> to vector<1x256xf32>
    %c0_26 = arith.constant 0 : index
    %c1_27 = arith.constant 1 : index
    %56 = vector.load %arg2[%c0_26, %c1_27] : memref<8x5xf32, #tpu.memory_space<vmem>>, vector<8x1xf32>
    %57 = vector.broadcast %55 : vector<1x256xf32> to vector<8x256xf32>
    %58 = vector.broadcast %56 : vector<8x1xf32> to vector<8x256xf32>
    %59 = arith.mulf %57, %58 : vector<8x256xf32>
    %60 = arith.addf %54, %59 : vector<8x256xf32>
    %61 = vector.extract_strided_slice %48 {offsets = [2, 0], sizes = [1, 256], strides = [1, 1]} : vector<8x256xf32> to vector<1x256xf32>
    %c0_28 = arith.constant 0 : index
    %c2_29 = arith.constant 2 : index
    %62 = vector.load %arg2[%c0_28, %c2_29] : memref<8x5xf32, #tpu.memory_space<vmem>>, vector<8x1xf32>
    %63 = vector.broadcast %61 : vector<1x256xf32> to vector<8x256xf32>
    %64 = vector.broadcast %62 : vector<8x1xf32> to vector<8x256xf32>
    %65 = arith.mulf %63, %64 : vector<8x256xf32>
    %66 = arith.addf %60, %65 : vector<8x256xf32>
    %67 = vector.extract_strided_slice %48 {offsets = [3, 0], sizes = [1, 256], strides = [1, 1]} : vector<8x256xf32> to vector<1x256xf32>
    %c0_30 = arith.constant 0 : index
    %c3_31 = arith.constant 3 : index
    %68 = vector.load %arg2[%c0_30, %c3_31] : memref<8x5xf32, #tpu.memory_space<vmem>>, vector<8x1xf32>
    %69 = vector.broadcast %67 : vector<1x256xf32> to vector<8x256xf32>
    %70 = vector.broadcast %68 : vector<8x1xf32> to vector<8x256xf32>
    %71 = arith.mulf %69, %70 : vector<8x256xf32>
    %72 = arith.addf %66, %71 : vector<8x256xf32>
    %73 = vector.broadcast %49 : vector<8x1xf32> to vector<8x256xf32>
    %74 = arith.addf %72, %73 : vector<8x256xf32>
    %cst_32 = arith.constant 0.000000e+00 : f32
    %75 = vector.broadcast %cst_32 : f32 to vector<8x256xf32>
    %76 = arith.maximumf %74, %75 : vector<8x256xf32>
    %c0_33 = arith.constant 0 : index
    %c0_34 = arith.constant 0 : index
    %77 = vector.load %arg4[%c0_33, %c0_34] : memref<16x256xf32, #tpu.memory_space<vmem>>, vector<8x256xf32>
    tpu.vector_store %arg4[%c0_33, %c0_34], %76 {strides = array<i32>} : memref<16x256xf32, #tpu.memory_space<vmem>>, vector<8x256xf32>,
    %78 = vector.extract_strided_slice %48 {offsets = [4, 0], sizes = [1, 256], strides = [1, 1]} : vector<8x256xf32> to vector<1x256xf32>
    %c0_35 = arith.constant 0 : index
    %c0_36 = arith.constant 0 : index
    %79 = vector.load %arg2[%c0_35, %c0_36] : memref<8x5xf32, #tpu.memory_space<vmem>>, vector<8x1xf32>
    %80 = vector.broadcast %78 : vector<1x256xf32> to vector<8x256xf32>
    %81 = vector.broadcast %79 : vector<8x1xf32> to vector<8x256xf32>
    %82 = arith.mulf %80, %81 : vector<8x256xf32>
    %83 = vector.extract_strided_slice %48 {offsets = [5, 0], sizes = [1, 256], strides = [1, 1]} : vector<8x256xf32> to vector<1x256xf32>
    %c0_37 = arith.constant 0 : index
    %c1_38 = arith.constant 1 : index
    %84 = vector.load %arg2[%c0_37, %c1_38] : memref<8x5xf32, #tpu.memory_space<vmem>>, vector<8x1xf32>
    %85 = vector.broadcast %83 : vector<1x256xf32> to vector<8x256xf32>
    %86 = vector.broadcast %84 : vector<8x1xf32> to vector<8x256xf32>
    %87 = arith.mulf %85, %86 : vector<8x256xf32>
    %88 = arith.addf %82, %87 : vector<8x256xf32>
    %89 = vector.extract_strided_slice %48 {offsets = [6, 0], sizes = [1, 256], strides = [1, 1]} : vector<8x256xf32> to vector<1x256xf32>
    %c0_39 = arith.constant 0 : index
    %c2_40 = arith.constant 2 : index
    %90 = vector.load %arg2[%c0_39, %c2_40] : memref<8x5xf32, #tpu.memory_space<vmem>>, vector<8x1xf32>
    %91 = vector.broadcast %89 : vector<1x256xf32> to vector<8x256xf32>
    %92 = vector.broadcast %90 : vector<8x1xf32> to vector<8x256xf32>
    %93 = arith.mulf %91, %92 : vector<8x256xf32>
    %94 = arith.addf %88, %93 : vector<8x256xf32>
    %95 = vector.extract_strided_slice %48 {offsets = [7, 0], sizes = [1, 256], strides = [1, 1]} : vector<8x256xf32> to vector<1x256xf32>
    %c0_41 = arith.constant 0 : index
    %c3_42 = arith.constant 3 : index
    %96 = vector.load %arg2[%c0_41, %c3_42] : memref<8x5xf32, #tpu.memory_space<vmem>>, vector<8x1xf32>
    %97 = vector.broadcast %95 : vector<1x256xf32> to vector<8x256xf32>
    %98 = vector.broadcast %96 : vector<8x1xf32> to vector<8x256xf32>
    %99 = arith.mulf %97, %98 : vector<8x256xf32>
    %100 = arith.addf %94, %99 : vector<8x256xf32>
    %101 = vector.broadcast %49 : vector<8x1xf32> to vector<8x256xf32>
    %102 = arith.addf %100, %101 : vector<8x256xf32>
    %cst_43 = arith.constant 0.000000e+00 : f32
    %103 = vector.broadcast %cst_43 : f32 to vector<8x256xf32>
    %104 = arith.maximumf %102, %103 : vector<8x256xf32>
    %c8_44 = arith.constant 8 : index
    %c0_45 = arith.constant 0 : index
    %105 = vector.load %arg4[%c8_44, %c0_45] : memref<16x256xf32, #tpu.memory_space<vmem>>, vector<8x256xf32>
    tpu.vector_store %arg4[%c8_44, %c0_45], %104 {strides = array<i32>} : memref<16x256xf32, #tpu.memory_space<vmem>>, vector<8x256xf32>,
    return
  }
  func.func @transform_0(%arg0: i32) -> (i32, i32) {
    %c0_i32 = arith.constant 0 : i32
    %c0_i32_0 = arith.constant 0 : i32
    %c0_i32_1 = arith.constant 0 : i32
    return %c0_i32, %c0_i32_0 : i32, i32
  }
  func.func @transform_1(%arg0: i32) -> (i32, i32) {
    %c0_i32 = arith.constant 0 : i32
    %c0_i32_0 = arith.constant 0 : i32
    %c0_i32_1 = arith.constant 0 : i32
    return %c0_i32, %c0_i32_0 : i32, i32
  }
  func.func @transform_2(%arg0: i32) -> (i32, i32) {
    %c0_i32 = arith.constant 0 : i32
    %c0_i32_0 = arith.constant 0 : i32
    %c0_i32_1 = arith.constant 0 : i32
    return %c0_i32, %c0_i32_0 : i32, i32
  }
  func.func @transform_3(%arg0: i32) -> (i32, i32) {
    %c0_i32 = arith.constant 0 : i32
    %c0_i32_0 = arith.constant 0 : i32
    %c0_i32_1 = arith.constant 0 : i32
    return %c0_i32, %c0_i32_0 : i32, i32
  }
}

</mosaic_0001>

<llo_original>
// kernel: tpu_custom_call.1
$region0: #{tpu_custom_call.1}
  #allocation0 [shape = 'u32[]', space=smem, size = 0x4, offset = 0x4, fixed_abs, tag = 'smem constant byte address 0x4 - core index']
  #allocation1 [shape = 'u32[144,128]{1,0:T(1,128)}', space=vmem, size = 0x12000, scoped, tag = 'internal scratch']
  %s0 = inlined_call_operand.hbm [shape: f32[8,10], index: 0, kind: input, shape index: {}]
  %s1 = inlined_call_operand.hbm [shape: f32[8,5], index: 1, kind: input, shape index: {}]
  %s2 = inlined_call_operand.hbm [shape: f32[8,290], index: 2, kind: input, shape index: {}]
  %s3 = inlined_call_operand.hbm [shape: f32[16,256], index: 3, kind: output, shape index: {}]
  %s4 = sld [smem:[#allocation0]]
  $region34: #{tpu_custom_call.1} parent=0
    _
  %s6 = ssub.s32 1, %s4
  %s7 = scalar_select 0, %s6, %s4
  $region1: #{tpu_custom_call.1} parent=0
    #allocation2 [shape = 'u8[4096]{0}', space=vmem, size = 0x1000, scoped, tag = 'input window, operand 0, single buffered']
    #allocation3 [shape = 's32[1]{0}', space=sflag, size = 0x4, scoped, tag = 'scoped memory for tpu_custom_call.1']
    #allocation4 [shape = 's32[1]{0}', space=sflag, size = 0x4, scoped, tag = 'scoped memory for tpu_custom_call.1']
    #allocation5 [shape = 'u8[4096]{0}', space=vmem, size = 0x1000, scoped, tag = 'input window, operand 1, single buffered']
    #allocation6 [shape = 's32[1]{0}', space=sflag, size = 0x4, scoped, tag = 'scoped memory for tpu_custom_call.1']
    #allocation7 [shape = 'u8[12288]{0}', space=vmem, size = 0x3000, scoped, tag = 'input window, operand 2, single buffered']
    #allocation8 [shape = 'u8[16384]{0}', space=vmem, size = 0x4000, scoped, tag = 'output window, operand 0, single buffered']
    %8 = vsyncpa [#allocation3], 0
    %9 = vsyncpa [#allocation6], 0
    %10 = vsyncpa [#allocation4], 0
    // Predicated region
    $region2: #{tpu_custom_call.1} parent=1 // pred_check
      _
    $region3: #{tpu_custom_call.1} parent=1 // pred_check_branch
      %12 = sbr.rel (0) target = $region5
    $region4: #{tpu_custom_call.1} parent=1 // pred_region
      %s14 = ssub.s32 128, 128
      %15 = vsyncadd [#allocation3], %s14
      %s17 = sshll.u32 [#allocation2], 4
      %s18 = int_to_ptr.vmem [resolvable:$true] %s17
      %20 = dma.hbm_to_vmem [thread:$0]  %s0, 128, %s18, [#allocation3]
    $region5: #{tpu_custom_call.1} parent=1 // pred_fallthru
      _
    // Predicated region
    $region6: #{tpu_custom_call.1} parent=1 // pred_check
      _
    $region7: #{tpu_custom_call.1} parent=1 // pred_check_branch
      %22 = sbr.rel (0) target = $region9
    $region8: #{tpu_custom_call.1} parent=1 // pred_region
      %s24 = ssub.s32 128, 128
      %25 = vsyncadd [#allocation6], %s24
      %s27 = sshll.u32 [#allocation5], 4
      %s28 = int_to_ptr.vmem [resolvable:$true] %s27
      %30 = dma.hbm_to_vmem [thread:$0]  %s1, 128, %s28, [#allocation6]
    $region9: #{tpu_custom_call.1} parent=1 // pred_fallthru
      _
    // Predicated region
    $region10: #{tpu_custom_call.1} parent=1 // pred_check
      _
    $region11: #{tpu_custom_call.1} parent=1 // pred_check_branch
      %32 = sbr.rel (0) target = $region13
    $region12: #{tpu_custom_call.1} parent=1 // pred_region
      %s34 = ssub.s32 384, 384
      %35 = vsyncadd [#allocation6], %s34
      %s37 = sshll.u32 [#allocation7], 4
      %s38 = int_to_ptr.vmem [resolvable:$true] %s37
      %40 = dma.hbm_to_vmem [thread:$0]  %s2, 384, %s38, [#allocation6]
    $region13: #{tpu_custom_call.1} parent=1 // pred_fallthru
      _
    // Predicated region
    $region14: #{tpu_custom_call.1} parent=1 // pred_check
      _
    $region15: #{tpu_custom_call.1} parent=1 // pred_check_branch
      %42 = sbr.rel (0) target = $region17
    $region16: #{tpu_custom_call.1} parent=1 // pred_region
      %43 = dma.done [#allocation3], 128
    $region17: #{tpu_custom_call.1} parent=1 // pred_fallthru
      _
    // Predicated region
    $region18: #{tpu_custom_call.1} parent=1 // pred_check
      _
    $region19: #{tpu_custom_call.1} parent=1 // pred_check_branch
      %45 = sbr.rel (0) target = $region21
    $region20: #{tpu_custom_call.1} parent=1 // pred_region
      %46 = dma.done [#allocation6], 128
    $region21: #{tpu_custom_call.1} parent=1 // pred_fallthru
      _
    // Predicated region
    $region22: #{tpu_custom_call.1} parent=1 // pred_check
      _
    $region23: #{tpu_custom_call.1} parent=1 // pred_check_branch
      %48 = sbr.rel (0) target = $region25
    $region24: #{tpu_custom_call.1} parent=1 // pred_region
      %49 = dma.done [#allocation6], 384
    $region25: #{tpu_custom_call.1} parent=1 // pred_fallthru
      _
    %v50 = vld [vmem:[#allocation7] sm:$0xff]
    %v51 = vld [vmem:[#allocation7 + $0x8] sm:$0xff]
    %v52 = vld [vmem:[#allocation2] sm:$0xff]
    %54 = vset.pattern.permute.xlu0 0
    %55 = vperm.xlu0 %54, %v52
    %v56 = vpop.permute.xlu0 %55
    %v58 = vmul.f32 %v50, %v56
    %v59 = vmul.f32 %v51, %v56
    %v60 = vld [vmem:[#allocation7] sm:$0xff]
    %v61 = vld [vmem:[#allocation7 + $0x8] sm:$0xff]
    %v62 = vld [vmem:[#allocation7 + $0x10] sm:$0xff]
    %63 = vset.pattern.permute.xlu0 1
    %64 = vperm.xlu0 %63, %v52
    %v65 = vpop.permute.xlu0 %64
    %v67 = vmul.f32 %v60, %v65
    %v68 = vmul.f32 %v61, %v65
    %v69 = vmul.f32 %v62, %v65
    %73 = vrot.lane.b32.xlu0 %v67, 127
    %v74 = vpop.permute.xlu0 %73
    %75 = vrot.lane.b32.xlu0 %v68, 127
    %v76 = vpop.permute.xlu0 %75
    %77 = vrot.lane.b32.xlu0 %v69, 127
    %v78 = vpop.permute.xlu0 %77
    %vm79 = vcmask 1039360
    %v80 = vsel %vm79, %v74, %v76
    %v81 = vsel %vm79, %v76, %v78
    %v84 = vadd.f32 %v58, %v80
    %v85 = vadd.f32 %v59, %v81
    %86 = vset.pattern.permute.xlu0 2
    %87 = vperm.xlu0 %86, %v52
    %v88 = vpop.permute.xlu0 %87
    %v90 = vmul.f32 %v60, %v88
    %v91 = vmul.f32 %v61, %v88
    %v92 = vmul.f32 %v62, %v88
    %96 = vrot.lane.b32.xlu0 %v90, 126
    %v97 = vpop.permute.xlu0 %96
    %98 = vrot.lane.b32.xlu0 %v91, 126
    %v99 = vpop.permute.xlu0 %98
    %100 = vrot.lane.b32.xlu0 %v92, 126
    %v101 = vpop.permute.xlu0 %100
    %vm102 = vcmask 1031168
    %v103 = vsel %vm102, %v97, %v99
    %v104 = vsel %vm102, %v99, %v101
    %v107 = vadd.f32 %v84, %v103
    %v108 = vadd.f32 %v85, %v104
    %109 = vset.pattern.permute.xlu0 3
    %110 = vperm.xlu0 %109, %v52
    %v111 = vpop.permute.xlu0 %110
    %v113 = vmul.f32 %v60, %v111
    %v114 = vmul.f32 %v61, %v111
    %v115 = vmul.f32 %v62, %v111
    %119 = vrot.lane.b32.xlu0 %v113, 112
    %v120 = vpop.permute.xlu0 %119
    %121 = vrot.lane.b32.xlu0 %v114, 112
    %v122 = vpop.permute.xlu0 %121
    %123 = vrot.lane.b32.xlu0 %v115, 112
    %v124 = vpop.permute.xlu0 %123
    %vm125 = vcmask 916480
    %v126 = vsel %vm125, %v120, %v122
    %v127 = vsel %vm125, %v122, %v124
    %v130 = vadd.f32 %v107, %v126
    %v131 = vadd.f32 %v108, %v127
    %132 = vset.pattern.permute.xlu0 4
    %133 = vperm.xlu0 %132, %v52
    %v134 = vpop.permute.xlu0 %133
    %v136 = vmul.f32 %v60, %v134
    %v137 = vmul.f32 %v61, %v134
    %v138 = vmul.f32 %v62, %v134
    %142 = vrot.lane.b32.xlu0 %v136, 111
    %v143 = vpop.permute.xlu0 %142
    %144 = vrot.lane.b32.xlu0 %v137, 111
    %v145 = vpop.permute.xlu0 %144
    %146 = vrot.lane.b32.xlu0 %v138, 111
    %v147 = vpop.permute.xlu0 %146
    %vm148 = vcmask 908288
    %v149 = vsel %vm148, %v143, %v145
    %v150 = vsel %vm148, %v145, %v147
    %v153 = vadd.f32 %v130, %v149
    %v154 = vadd.f32 %v131, %v150
    %155 = vset.pattern.permute.xlu0 5
    %156 = vperm.xlu0 %155, %v52
    %v157 = vpop.permute.xlu0 %156
    %v159 = vmul.f32 %v60, %v157
    %v160 = vmul.f32 %v61, %v157
    %v161 = vmul.f32 %v62, %v157
    %165 = vrot.lane.b32.xlu0 %v159, 110
    %v166 = vpop.permute.xlu0 %165
    %167 = vrot.lane.b32.xlu0 %v160, 110
    %v168 = vpop.permute.xlu0 %167
    %169 = vrot.lane.b32.xlu0 %v161, 110
    %v170 = vpop.permute.xlu0 %169
    %vm171 = vcmask 900096
    %v172 = vsel %vm171, %v166, %v168
    %v173 = vsel %vm171, %v168, %v170
    %v176 = vadd.f32 %v153, %v172
    %v177 = vadd.f32 %v154, %v173
    %178 = vset.pattern.permute.xlu0 6
    %179 = vperm.xlu0 %178, %v52
    %v180 = vpop.permute.xlu0 %179
    %v182 = vmul.f32 %v60, %v180
    %v183 = vmul.f32 %v61, %v180
    %v184 = vmul.f32 %v62, %v180
    %188 = vrot.lane.b32.xlu0 %v182, 96
    %v189 = vpop.permute.xlu0 %188
    %190 = vrot.lane.b32.xlu0 %v183, 96
    %v191 = vpop.permute.xlu0 %190
    %192 = vrot.lane.b32.xlu0 %v184, 96
    %v193 = vpop.permute.xlu0 %192
    %vm194 = vcmask 785408
    %v195 = vsel %vm194, %v189, %v191
    %v196 = vsel %vm194, %v191, %v193
    %v199 = vadd.f32 %v176, %v195
    %v200 = vadd.f32 %v177, %v196
    %201 = vset.pattern.permute.xlu0 7
    %202 = vperm.xlu0 %201, %v52
    %v203 = vpop.permute.xlu0 %202
    %v205 = vmul.f32 %v60, %v203
    %v206 = vmul.f32 %v61, %v203
    %v207 = vmul.f32 %v62, %v203
    %211 = vrot.lane.b32.xlu0 %v205, 95
    %v212 = vpop.permute.xlu0 %211
    %213 = vrot.lane.b32.xlu0 %v206, 95
    %v214 = vpop.permute.xlu0 %213
    %215 = vrot.lane.b32.xlu0 %v207, 95
    %v216 = vpop.permute.xlu0 %215
    %vm217 = vcmask 777216
    %v218 = vsel %vm217, %v212, %v214
    %v219 = vsel %vm217, %v214, %v216
    %v222 = vadd.f32 %v199, %v218
    %v223 = vadd.f32 %v200, %v219
    %224 = vset.pattern.permute.xlu0 8
    %225 = vperm.xlu0 %224, %v52
    %v226 = vpop.permute.xlu0 %225
    %v228 = vmul.f32 %v60, %v226
    %v229 = vmul.f32 %v61, %v226
    %v230 = vmul.f32 %v62, %v226
    %234 = vrot.lane.b32.xlu0 %v228, 94
    %v235 = vpop.permute.xlu0 %234
    %236 = vrot.lane.b32.xlu0 %v229, 94
    %v237 = vpop.permute.xlu0 %236
    %238 = vrot.lane.b32.xlu0 %v230, 94
    %v239 = vpop.permute.xlu0 %238
    %vm240 = vcmask 769024
    %v241 = vsel %vm240, %v235, %v237
    %v242 = vsel %vm240, %v237, %v239
    %v245 = vadd.f32 %v222, %v241
    %v246 = vadd.f32 %v223, %v242
    %247 = vset.pattern.permute.xlu0 9
    %248 = vperm.xlu0 %247, %v52
    %v249 = vpop.permute.xlu0 %248
    %v251 = vadd.f32 %v245, %v249
    %v252 = vadd.f32 %v246, %v249
    %v253 = vmax.f32 %v251, 0.0
    %v254 = vmax.f32 %v252, 0.0
    %v255 = vld [vmem:[#allocation5] sm:$0xff]
    %v256 = vlaneseq
    %v257 = vshrl.u32 %v256, 7
    %v258 = vsub.s32 0, %v257
    %v259 = vrot.slane %v253, %v258
    %v260 = vlaneseq
    %v261 = vshrl.u32 %v260, 7
    %v262 = vsub.s32 0, %v261
    %v263 = vrot.slane %v254, %v262
    %265 = vset.pattern.permute.xlu0 0
    %266 = vperm.xlu0 %265, %v255
    %v267 = vpop.permute.xlu0 %266
    %v269 = vmul.f32 %v259, %v267
    %v270 = vmul.f32 %v263, %v267
    %v271 = vlaneseq
    %v272 = vshrl.u32 %v271, 7
    %v273 = vsub.s32 1, %v272
    %v274 = vrot.slane %v253, %v273
    %v275 = vlaneseq
    %v276 = vshrl.u32 %v275, 7
    %v277 = vsub.s32 1, %v276
    %v278 = vrot.slane %v254, %v277
    %279 = vset.pattern.permute.xlu0 1
    %280 = vperm.xlu0 %279, %v255
    %v281 = vpop.permute.xlu0 %280
    %v283 = vmul.f32 %v274, %v281
    %v284 = vmul.f32 %v278, %v281
    %v285 = vadd.f32 %v269, %v283
    %v286 = vadd.f32 %v270, %v284
    %v287 = vlaneseq
    %v288 = vshrl.u32 %v287, 7
    %v289 = vsub.s32 2, %v288
    %v290 = vrot.slane %v253, %v289
    %v291 = vlaneseq
    %v292 = vshrl.u32 %v291, 7
    %v293 = vsub.s32 2, %v292
    %v294 = vrot.slane %v254, %v293
    %295 = vset.pattern.permute.xlu0 2
    %296 = vperm.xlu0 %295, %v255
    %v297 = vpop.permute.xlu0 %296
    %v299 = vmul.f32 %v290, %v297
    %v300 = vmul.f32 %v294, %v297
    %v301 = vadd.f32 %v285, %v299
    %v302 = vadd.f32 %v286, %v300
    %v303 = vlaneseq
    %v304 = vshrl.u32 %v303, 7
    %v305 = vsub.s32 3, %v304
    %v306 = vrot.slane %v253, %v305
    %v307 = vlaneseq
    %v308 = vshrl.u32 %v307, 7
    %v309 = vsub.s32 3, %v308
    %v310 = vrot.slane %v254, %v309
    %311 = vset.pattern.permute.xlu0 3
    %312 = vperm.xlu0 %311, %v255
    %v313 = vpop.permute.xlu0 %312
    %v315 = vmul.f32 %v306, %v313
    %v316 = vmul.f32 %v310, %v313
    %v317 = vadd.f32 %v301, %v315
    %v318 = vadd.f32 %v302, %v316
    %319 = vset.pattern.permute.xlu0 4
    %320 = vperm.xlu0 %319, %v255
    %v321 = vpop.permute.xlu0 %320
    %v323 = vadd.f32 %v317, %v321
    %v324 = vadd.f32 %v318, %v321
    %v325 = vmax.f32 %v323, 0.0
    %v326 = vmax.f32 %v324, 0.0
    %327 = vst [vmem:[#allocation8] sm:$0xff] %v325
    %328 = vst [vmem:[#allocation8 + $0x8] sm:$0xff] %v326
    %v329 = vld [vmem:[#allocation5] sm:$0xff]
    %v330 = vlaneseq
    %v331 = vshrl.u32 %v330, 7
    %v332 = vsub.s32 4, %v331
    %v333 = vrot.slane %v253, %v332
    %v334 = vlaneseq
    %v335 = vshrl.u32 %v334, 7
    %v336 = vsub.s32 4, %v335
    %v337 = vrot.slane %v254, %v336
    %339 = vset.pattern.permute.xlu0 0
    %340 = vperm.xlu0 %339, %v329
    %v341 = vpop.permute.xlu0 %340
    %v343 = vmul.f32 %v333, %v341
    %v344 = vmul.f32 %v337, %v341
    %v345 = vlaneseq
    %v346 = vshrl.u32 %v345, 7
    %v347 = vsub.s32 5, %v346
    %v348 = vrot.slane %v253, %v347
    %v349 = vlaneseq
    %v350 = vshrl.u32 %v349, 7
    %v351 = vsub.s32 5, %v350
    %v352 = vrot.slane %v254, %v351
    %353 = vset.pattern.permute.xlu0 1
    %354 = vperm.xlu0 %353, %v329
    %v355 = vpop.permute.xlu0 %354
    %v357 = vmul.f32 %v348, %v355
    %v358 = vmul.f32 %v352, %v355
    %v359 = vadd.f32 %v343, %v357
    %v360 = vadd.f32 %v344, %v358
    %v361 = vlaneseq
    %v362 = vshrl.u32 %v361, 7
    %v363 = vsub.s32 6, %v362
    %v364 = vrot.slane %v253, %v363
    %v365 = vlaneseq
    %v366 = vshrl.u32 %v365, 7
    %v367 = vsub.s32 6, %v366
    %v368 = vrot.slane %v254, %v367
    %369 = vset.pattern.permute.xlu0 2
    %370 = vperm.xlu0 %369, %v329
    %v371 = vpop.permute.xlu0 %370
    %v373 = vmul.f32 %v364, %v371
    %v374 = vmul.f32 %v368, %v371
    %v375 = vadd.f32 %v359, %v373
    %v376 = vadd.f32 %v360, %v374
    %v377 = vlaneseq
    %v378 = vshrl.u32 %v377, 7
    %v379 = vsub.s32 7, %v378
    %v380 = vrot.slane %v253, %v379
    %v381 = vlaneseq
    %v382 = vshrl.u32 %v381, 7
    %v383 = vsub.s32 7, %v382
    %v384 = vrot.slane %v254, %v383
    %385 = vset.pattern.permute.xlu0 3
    %386 = vperm.xlu0 %385, %v329
    %v387 = vpop.permute.xlu0 %386
    %v389 = vmul.f32 %v380, %v387
    %v390 = vmul.f32 %v384, %v387
    %v391 = vadd.f32 %v375, %v389
    %v392 = vadd.f32 %v376, %v390
    %v393 = vadd.f32 %v391, %v321
    %v394 = vadd.f32 %v392, %v321
    %v395 = vmax.f32 %v393, 0.0
    %v396 = vmax.f32 %v394, 0.0
    %397 = vst [vmem:[#allocation8 + $0x10] sm:$0xff] %v395
    %398 = vst [vmem:[#allocation8 + $0x18] sm:$0xff] %v396
    // Predicated region
    $region26: #{tpu_custom_call.1} parent=1 // pred_check
      _
    $region27: #{tpu_custom_call.1} parent=1 // pred_check_branch
      %400 = sbr.rel (0) target = $region29
    $region28: #{tpu_custom_call.1} parent=1 // pred_region
      %s402 = ssub.s32 512, 512
      %403 = vsyncadd [#allocation4], %s402
      %s404 = sshll.u32 [#allocation8], 4
      %s405 = int_to_ptr.vmem [resolvable:$true] %s404
      %410 = dma.vmem_to_hbm [thread:$0]  %s405, 512, %s3, [#allocation4], 256, 256, 16
    $region29: #{tpu_custom_call.1} parent=1 // pred_fallthru
      _
    // Predicated region
    $region30: #{tpu_custom_call.1} parent=1 // pred_check
      _
    $region31: #{tpu_custom_call.1} parent=1 // pred_check_branch
      %412 = sbr.rel (0) target = $region33
    $region32: #{tpu_custom_call.1} parent=1 // pred_region
      %413 = dma.done [#allocation4], 512
    $region33: #{tpu_custom_call.1} parent=1 // pred_fallthru
      _
    %414 = vsyncpa [#allocation3], 1
    %415 = vsyncpa [#allocation6], 1
    %416 = vsyncpa [#allocation4], 1

</llo_original>
